<compile_context>
chip_gen: v7x
topology: tpu7x:2x2x1
jax: 0.10.0
libtpu: 0.0.40
codegen_flags: <defaults>
</compile_context>

<pallas_src>
import functools

import jax
import jax.numpy as jnp
import numpy as np
from jax import lax
from jax.experimental import pallas as pl
from jax.experimental.pallas import tpu as pltpu

EPS = 1e-5
LANE = 128


def _round_up(x, m):
    return (x + m - 1) // m * m


# --------------------------------------------------------------------------------------- #
# pltpu.roll rotation-direction probe (portability guard)
# --------------------------------------------------------------------------------------- #
def probe_roll_sign():
    """Returns sign s such that pltpu.roll(x, (s*off) % n, axis)[.., p] == x[.., p+off]
    for non-wrapping positions.  Keeps the conv/pool shift math robust across jax versions."""

    def kernel(x_ref, o_ref):
        o_ref[...] = pltpu.roll(x_ref[...], 1, axis=1)

    x = jnp.broadcast_to(jnp.arange(LANE, dtype=jnp.float32), (8, LANE))
    out = pl.pallas_call(kernel, out_shape=jax.ShapeDtypeStruct((8, LANE), jnp.float32))(x)
    first = int(out[0, 0])
    if first == LANE - 1:      # np.roll convention: result[p] = x[p - shift]
        return -1
    if first == 1:             # opposite convention: result[p] = x[p + shift]
        return 1
    raise RuntimeError(f"unexpected pltpu.roll behaviour (out[0,0]={first})")


# --------------------------------------------------------------------------------------- #
# In-kernel helpers — all operate on (C, P) tiles: channels on sublanes, flat spatial on lanes
# --------------------------------------------------------------------------------------- #
def _shifted(x, off, width, roll_sign):
    """x[p + off] along the lane axis (valid for all non-wrapping positions)."""
    if off == 0:
        return x
    return pltpu.roll(x, (roll_sign * off) % width, axis=1)


def _conv3x3_flat(x, w_taps_ref, row_stride, width, roll_sign):
    """'Same' 3x3 conv on the flat zero-padded layout (p = row * row_stride + col).

    x: (Cin, P) zero-padded tile.  w_taps_ref: (9, Cout, Cin) with tap t = dh*3 + dw.
    Returns (Cout, P); only interior positions are valid (border is masked by callers).
    """
    acc = None
    for t in range(9):
        dh, dw = t // 3, t % 3
        off = (dh - 1) * row_stride + (dw - 1)          # y[p] needs x[p + off]
        term = jnp.dot(w_taps_ref[t], _shifted(x, off, width, roll_sign),
                       preferred_element_type=jnp.float32)
        acc = term if acc is None else acc + term
    return acc


def _kwinners(r, k):
    """Per spatial position keep the k largest channel activations (ties kept)."""
    c = r.shape[0]
    rank = jnp.zeros_like(r)
    for j in range(c):                      # channels on sublanes -> cheap sublane broadcasts
        rank = rank + (r[j:j + 1, :] > r).astype(r.dtype)
    return jnp.where(rank < float(k), r, 0.0)


def _masked_channel_stats(y, mask):
    """Per-channel sum and sum-of-squares over interior (mask==1) positions."""
    ym = y * mask
    return (jnp.sum(ym, axis=1, keepdims=True),
            jnp.sum(ym * y, axis=1, keepdims=True))


# --------------------------------------------------------------------------------------- #
# Pallas kernels (one grid step = one image)
# --------------------------------------------------------------------------------------- #
def _stats_kernel(x_ref, mask_ref, w_ref, stats_ref, *, row_stride, width, roll_sign):
    """BatchNorm pass 1: per-channel sum / sumsq of conv3x3(x) over the interior."""
    y = _conv3x3_flat(x_ref[...], w_ref, row_stride, width, roll_sign)
    s, ss = _masked_channel_stats(y, mask_ref[...])
    stats_ref[:, 0:1] = s
    stats_ref[:, 1:2] = ss


def _apply_res_stats_kernel(x_ref, mask_ref, w_ref, scale_ref, shift_ref,
                            wres_ref, bres_ref, wnext_ref,
                            kwin_ref, res_ref, stats_ref,
                            *, k, row_stride, width, roll_sign):
    """pre-stage apply (conv + folded BN + ReLU + kwin) + fused residual 1x1 conv
    + fused BatchNorm pass 1 of the next conv."""
    mask = mask_ref[...]
    y = _conv3x3_flat(x_ref[...], w_ref, row_stride, width, roll_sign)
    r = jnp.maximum(y * scale_ref[...] + shift_ref[...], 0.0)          # folded BN + ReLU
    # residual branch taps the pre-kwinners ReLU activation (1x1 conv; bias kept - no BN after)
    res_ref[...] = (jnp.dot(wres_ref[...], r, preferred_element_type=jnp.float32)
                    + bres_ref[...])
    kw = _kwinners(r, k) * mask     # zero border ring + lane pad -> valid zero-padding downstream
    kwin_ref[...] = kw
    # BatchNorm pass 1 of the next conv, fused so kw is not re-read from HBM
    y2 = _conv3x3_flat(kw, wnext_ref, row_stride, width, roll_sign)
    s, ss = _masked_channel_stats(y2, mask)
    stats_ref[:, 0:1] = s
    stats_ref[:, 1:2] = ss


def _apply_stats_kernel(x_ref, mask_ref, w_ref, scale_ref, shift_ref,
                        kwin_ref, stats_ref, *, k, row_stride, width, roll_sign):
    """conv1-stage apply + fused stats of the following conv (which reuses the same weights)."""
    mask = mask_ref[...]
    y = _conv3x3_flat(x_ref[...], w_ref, row_stride, width, roll_sign)
    r = jnp.maximum(y * scale_ref[...] + shift_ref[...], 0.0)
    kw = _kwinners(r, k) * mask
    kwin_ref[...] = kw
    y2 = _conv3x3_flat(kw, w_ref, row_stride, width, roll_sign)
    s, ss = _masked_channel_stats(y2, mask)
    stats_ref[:, 0:1] = s
    stats_ref[:, 1:2] = ss


def _apply_add_pool_kernel(x_ref, res_ref, w_ref, scale_ref, shift_ref, out_ref,
                           *, k, row_stride, width, roll_sign):
    """Last-stage apply + residual add + 2x2 max-pool.

    The pooled value is left at the top-left padded position of each 2x2 window; the tiny
    strided extraction to NCHW happens in the JAX wrapper.
    """
    y = _conv3x3_flat(x_ref[...], w_ref, row_stride, width, roll_sign)
    r = jnp.maximum(y * scale_ref[...] + shift_ref[...], 0.0)
    s = _kwinners(r, k) + res_ref[...]        # border positions are never extracted
    s01 = _shifted(s, 1, width, roll_sign)
    s10 = _shifted(s, row_stride, width, roll_sign)
    s11 = _shifted(s, row_stride + 1, width, roll_sign)
    out_ref[...] = jnp.maximum(jnp.maximum(s, s01), jnp.maximum(s10, s11))


# --------------------------------------------------------------------------------------- #
# Forward pass: 4 pallas_calls + tiny JAX glue (layout prep, BN folding, pool extraction)
# --------------------------------------------------------------------------------------- #
_COMPILER_PARAMS = pltpu.CompilerParams(
    dimension_semantics=("parallel",),          # per-image tiles are independent (megacore)
    vmem_limit_bytes=32 * 1024 * 1024,
)


def _per_image_spec(c, p):
    return pl.BlockSpec((None, c, p), lambda i: (i, 0, 0))


def _replicated_spec(shape):
    return pl.BlockSpec(shape, lambda i, _nd=len(shape): (0,) * _nd)


def full_block_forward(x_nchw, params, k, roll_sign=-1):
    x_nchw = x_nchw.astype(jnp.float32)
    n, cin, h, w = x_nchw.shape
    cout = params["w_pre"].shape[0]
    assert h % 2 == 0 and w % 2 == 0

    rs = w + 2                              # row stride of the padded flat layout
    pv = (h + 2) * rs                       # valid flat positions per image
    pw = _round_up(pv, LANE)                # lane-padded tile width (multiple of 128)
    cnt = float(n * h * w)                  # elements per channel in the batch statistics

    # ---- layout prep: NCHW -> (N, C, PW) zero-padded flat, plus an interior mask ----------
    xpad = jnp.pad(x_nchw, ((0, 0), (0, 0), (1, 1), (1, 1))).reshape(n, cin, pv)
    xf = jnp.pad(xpad, ((0, 0), (0, 0), (0, pw - pv)))

    rows = jnp.arange(h + 2)
    cols = jnp.arange(w + 2)
    m2 = ((rows >= 1) & (rows <= h))[:, None] & ((cols >= 1) & (cols <= w))[None, :]
    mask = jnp.pad(m2.reshape(1, pv).astype(jnp.float32), ((0, 0), (0, pw - pv)))

    def taps(wt):                           # torch (Cout, Cin, 3, 3) -> (9, Cout, Cin)
        return jnp.transpose(wt, (2, 3, 0, 1)).reshape(9, wt.shape[0], wt.shape[1])

    w_pre = taps(params["w_pre"])
    w_1 = taps(params["w1"])
    w_res = params["w_res"].reshape(cout, cout)
    b_res = params["b_res"].reshape(cout, 1)
    # NOTE: conv biases b_pre / b1 are intentionally unused — they cancel exactly under
    # training-mode BatchNorm (mean subtraction), so the kernels skip that work.

    def fold_bn(stats, gamma, beta):
        tot = jnp.sum(stats, axis=0)                       # (C, 2) summed over images
        mean = tot[:, 0] / cnt
        var = jnp.maximum(tot[:, 1] / cnt - mean * mean, 0.0)
        scale = gamma * lax.rsqrt(var + EPS)
        shift = beta - mean * scale
        return scale.reshape(cout, 1), shift.reshape(cout, 1)

    act = jax.ShapeDtypeStruct((n, cout, pw), jnp.float32)
    stat = jax.ShapeDtypeStruct((n, cout, 2), jnp.float32)
    static = dict(row_stride=rs, width=pw, roll_sign=roll_sign)

    # ---- A: BatchNorm pass 1 for pre_conv --------------------------------------------------
    stats1 = pl.pallas_call(
        functools.partial(_stats_kernel, **static),
        out_shape=stat,
        grid=(n,),
        in_specs=[_per_image_spec(cin, pw), _replicated_spec((1, pw)),
                  _replicated_spec((9, cout, cin))],
        out_specs=_per_image_spec(cout, 2),
        compiler_params=_COMPILER_PARAMS,
    )(xf, mask, w_pre)
    sc1, sh1 = fold_bn(stats1, params["g_pre"], params["be_pre"])

    # ---- B: pre-stage apply + residual 1x1 conv + BN pass 1 for conv1(kwin_pre) ------------
    kwin_pre, res, stats2 = pl.pallas_call(
        functools.partial(_apply_res_stats_kernel, k=k, **static),
        out_shape=(act, act, stat),
        grid=(n,),
        in_specs=[_per_image_spec(cin, pw), _replicated_spec((1, pw)),
                  _replicated_spec((9, cout, cin)),
                  _replicated_spec((cout, 1)), _replicated_spec((cout, 1)),
                  _replicated_spec((cout, cout)), _replicated_spec((cout, 1)),
                  _replicated_spec((9, cout, cout))],
        out_specs=(_per_image_spec(cout, pw), _per_image_spec(cout, pw),
                   _per_image_spec(cout, 2)),
        compiler_params=_COMPILER_PARAMS,
    )(xf, mask, w_pre, sc1, sh1, w_res, b_res, w_1)
    sc2, sh2 = fold_bn(stats2, params["g1"], params["be1"])

    # ---- C: conv1-stage apply -> kwin1 + BN pass 1 for conv1(kwin1) ------------------------
    kwin1, stats3 = pl.pallas_call(
        functools.partial(_apply_stats_kernel, k=k, **static),
        out_shape=(act, stat),
        grid=(n,),
        in_specs=[_per_image_spec(cout, pw), _replicated_spec((1, pw)),
                  _replicated_spec((9, cout, cout)),
                  _replicated_spec((cout, 1)), _replicated_spec((cout, 1))],
        out_specs=(_per_image_spec(cout, pw), _per_image_spec(cout, 2)),
        compiler_params=_COMPILER_PARAMS,
    )(kwin_pre, mask, w_1, sc2, sh2)
    sc3, sh3 = fold_bn(stats3, params["g1"], params["be1"])

    # ---- D: conv1-stage apply (reused) -> kwin2 + residual add + 2x2 max-pool --------------
    pooled_full = pl.pallas_call(
        functools.partial(_apply_add_pool_kernel, k=k, **static),
        out_shape=act,
        grid=(n,),
        in_specs=[_per_image_spec(cout, pw), _per_image_spec(cout, pw),
                  _replicated_spec((9, cout, cout)),
                  _replicated_spec((cout, 1)), _replicated_spec((cout, 1))],
        out_specs=_per_image_spec(cout, pw),
        compiler_params=_COMPILER_PARAMS,
    )(kwin1, res, w_1, sc3, sh3)

    # strided extraction of the pooled interior (tiny gather) -> NCHW output
    out = pooled_full[:, :, :pv].reshape(n, cout, h + 2, w + 2)
    return out[:, :, 1:h + 1:2, 1:w + 1:2]


# --------------------------------------------------------------------------------------- #
# Pure-JAX reference (straightforward dense NCHW implementation of the PyTorch forward)
# --------------------------------------------------------------------------------------- #
def reference_forward(x, params, k):
    n, _, h, w = x.shape

    def conv3x3(a, wt, b):
        ap = jnp.pad(a, ((0, 0), (0, 0), (1, 1), (1, 1)))
        y = jnp.zeros((n, wt.shape[0], h, w), jnp.float32)
        for dh in range(3):
            for dw in range(3):
                y = y + jnp.einsum("oi,nihw->nohw", wt[:, :, dh, dw],
                                   ap[:, :, dh:dh + h, dw:dw + w],
                                   precision=lax.Precision.HIGHEST)
        return y + b.reshape(1, -1, 1, 1)

    def bn(y, g, b):
        mean = jnp.mean(y, axis=(0, 2, 3), keepdims=True)
        var = jnp.mean(jnp.square(y - mean), axis=(0, 2, 3), keepdims=True)
        return (y - mean) * lax.rsqrt(var + EPS) * g.reshape(1, -1, 1, 1) + b.reshape(1, -1, 1, 1)

    def kwin(y):
        rank = jnp.sum((y[:, :, None] > y[:, None, :]).astype(y.dtype), axis=1)
        return jnp.where(rank < float(k), y, 0.0)

    a = jax.nn.relu(bn(conv3x3(x, params["w_pre"], params["b_pre"]),
                       params["g_pre"], params["be_pre"]))
    res = jnp.einsum("oi,nihw->nohw", params["w_res"].reshape(a.shape[1], a.shape[1]), a,
                     precision=lax.Precision.HIGHEST) + params["b_res"].reshape(1, -1, 1, 1)
    a = kwin(a)
    a = kwin(jax.nn.relu(bn(conv3x3(a, params["w1"], params["b1"]),
                            params["g1"], params["be1"])))
    a = kwin(jax.nn.relu(bn(conv3x3(a, params["w1"], params["b1"]),
                            params["g1"], params["be1"])))
    s = a + res
    return s.reshape(n, -1, h // 2, 2, w // 2, 2).max(axis=(3, 5))


# --------------------------------------------------------------------------------------- #
# Deterministic parameter init + driver
# --------------------------------------------------------------------------------------- #
def init_params(key, input_filters, output_filters):
    ks = jax.random.split(key, 10)
    f32 = jnp.float32
    return {
        "w_pre": 0.1 * jax.random.normal(ks[0], (output_filters, input_filters, 3, 3), f32),
        "b_pre": 0.1 * jax.random.normal(ks[1], (output_filters,), f32),
        "g_pre": 1.0 + 0.1 * jax.random.normal(ks[2], (output_filters,), f32),
        "be_pre": 0.1 * jax.random.normal(ks[3], (output_filters,), f32),
        "w1": 0.1 * jax.random.normal(ks[4], (output_filters, output_filters, 3, 3), f32),
        "b1": 0.1 * jax.random.normal(ks[5], (output_filters,), f32),
        "g1": 1.0 + 0.1 * jax.random.normal(ks[6], (output_filters,), f32),
        "be1": 0.1 * jax.random.normal(ks[7], (output_filters,), f32),
        "w_res": 0.1 * jax.random.normal(ks[8], (output_filters, output_filters, 1, 1), f32),
        "b_res": 0.1 * jax.random.normal(ks[9], (output_filters,), f32),
        # conv2 / bn2 / kwin2-params exist in __init__ but are never used by forward().
    }


if __name__ == "__main__":
    input_filters, output_filters, sparsity = 4, 8, 0.5
    k = max(4, int(output_filters * sparsity))            # = 4

    key = jax.random.PRNGKey(0)
    k_params, k_x = jax.random.split(key)
    params = init_params(k_params, input_filters, output_filters)
    x = jax.random.normal(k_x, (2, input_filters, 16, 16), jnp.float32)   # NCHW

    roll_sign = probe_roll_sign()
    fwd = jax.jit(functools.partial(full_block_forward, k=k, roll_sign=roll_sign))
    out = fwd(x, params)
    jax.block_until_ready(out)

    assert out.shape == (2, output_filters, 8, 8), out.shape
    assert bool(jnp.isfinite(out).all())

    # Structural-correctness check against a plain-JAX reference.  The criterion is deliberately
    # robust: k-winners is a discrete selection, so tiny fp differences (e.g. TPU matmul
    # precision) can flip rare near-ties and perturb a handful of outputs; a genuine structural
    # bug (wrong shift direction, tap/weight pairing, BN stats, pooling index) makes most
    # elements wrong by O(1) and is caught with a huge margin.
    ref = np.asarray(jax.jit(functools.partial(reference_forward, k=k))(x, params))
    got = np.asarray(out)
    rel = np.abs(got - ref) / (np.abs(ref) + 1e-3)
    assert np.median(rel) < 2e-2 and (rel < 0.1).mean() > 0.9, (
        f"Pallas output deviates from the JAX reference: median rel err {np.median(rel):.3e}, "
        f"fraction of elements with rel err >= 0.1: {(rel >= 0.1).mean():.3f}")

    print("KERNEL_OK")
</pallas_src>

<mosaic_0001>
module attributes {stable_mosaic.version = 11 : i64} {
  func.func @kernel(%arg0: memref<8x128xf32, #tpu.memory_space<vmem>>, %arg1: memref<8x128xf32, #tpu.memory_space<vmem>>) attributes {dimension_semantics = [], scalar_prefetch = 0 : i64, scratch_operands = 0 : i64, tpu.core_type = #tpu.core_type<tc>} {
    %c0 = arith.constant 0 : index
    %c0_0 = arith.constant 0 : index
    %0 = vector.load %arg0[%c0, %c0_0] : memref<8x128xf32, #tpu.memory_space<vmem>>, vector<8x128xf32>
    %c1_i32 = arith.constant 1 : i32
    %1 = tpu.dynamic_rotate %0 by %c1_i32 dim 1 : vector<8x128xf32>, i32 -> vector<8x128xf32>
    %c0_1 = arith.constant 0 : index
    %c0_2 = arith.constant 0 : index
    %2 = vector.load %arg1[%c0_1, %c0_2] : memref<8x128xf32, #tpu.memory_space<vmem>>, vector<8x128xf32>
    tpu.vector_store %arg1[%c0_1, %c0_2], %1 {strides = array<i32>} : memref<8x128xf32, #tpu.memory_space<vmem>>, vector<8x128xf32>,
    return
  }
}

</mosaic_0001>

<llo_original>
// kernel: tpu_custom_call.1
$region0: #{tpu_custom_call.1}
  #allocation0 [shape = 'u32[]', space=smem, size = 0x4, offset = 0x4, fixed_abs, tag = 'smem constant byte address 0x4 - core index']
  #allocation1 [shape = 'u32[144,128]{1,0:T(1,128)}', space=vmem, size = 0x12000, scoped, tag = 'internal scratch']
  %s0 = inlined_call_operand.hbm [shape: f32[8,128], index: 0, kind: input, shape index: {}]
  %s1 = inlined_call_operand.hbm [shape: f32[8,128], index: 1, kind: output, shape index: {}]
  %s2 = sld [smem:[#allocation0]]
  $region18: #{tpu_custom_call.1} parent=0
    _
  %s4 = ssub.s32 1, %s2
  %s5 = scalar_select 0, %s4, %s2
  $region1: #{tpu_custom_call.1} parent=0
    #allocation2 [shape = 'u8[4096]{0}', space=vmem, size = 0x1000, scoped, tag = 'input window, operand 0, single buffered']
    #allocation3 [shape = 's32[1]{0}', space=sflag, size = 0x4, scoped, tag = 'scoped memory for tpu_custom_call.1']
    #allocation4 [shape = 's32[1]{0}', space=sflag, size = 0x4, scoped, tag = 'scoped memory for tpu_custom_call.1']
    #allocation5 [shape = 'u8[4096]{0}', space=vmem, size = 0x1000, scoped, tag = 'output window, operand 0, single buffered']
    %6 = vsyncpa [#allocation3], 0
    %7 = vsyncpa [#allocation4], 0
    // Predicated region
    $region2: #{tpu_custom_call.1} parent=1 // pred_check
      _
    $region3: #{tpu_custom_call.1} parent=1 // pred_check_branch
      %9 = sbr.rel (0) target = $region5
    $region4: #{tpu_custom_call.1} parent=1 // pred_region
      %s11 = ssub.s32 128, 128
      %12 = vsyncadd [#allocation3], %s11
      %s14 = sshll.u32 [#allocation2], 4
      %s15 = int_to_ptr.vmem [resolvable:$true] %s14
      %17 = dma.hbm_to_vmem [thread:$0]  %s0, 128, %s15, [#allocation3]
    $region5: #{tpu_custom_call.1} parent=1 // pred_fallthru
      _
    // Predicated region
    $region6: #{tpu_custom_call.1} parent=1 // pred_check
      _
    $region7: #{tpu_custom_call.1} parent=1 // pred_check_branch
      %19 = sbr.rel (0) target = $region9
    $region8: #{tpu_custom_call.1} parent=1 // pred_region
      %20 = dma.done [#allocation3], 128
    $region9: #{tpu_custom_call.1} parent=1 // pred_fallthru
      _
    %v21 = vld [vmem:[#allocation2] sm:$0xff]
    %22 = vrot.lane.b32.xlu0 %v21, 1
    %v23 = vpop.permute.xlu0 %22
    %24 = vst [vmem:[#allocation5] sm:$0xff] %v23
    // Predicated region
    $region10: #{tpu_custom_call.1} parent=1 // pred_check
      _
    $region11: #{tpu_custom_call.1} parent=1 // pred_check_branch
      %26 = sbr.rel (0) target = $region13
    $region12: #{tpu_custom_call.1} parent=1 // pred_region
      %s28 = ssub.s32 128, 128
      %29 = vsyncadd [#allocation4], %s28
      %s31 = sshll.u32 [#allocation5], 4
      %s32 = int_to_ptr.vmem [resolvable:$true] %s31
      %34 = dma.vmem_to_hbm [thread:$0]  %s32, 128, %s1, [#allocation4]
    $region13: #{tpu_custom_call.1} parent=1 // pred_fallthru
      _
    // Predicated region
    $region14: #{tpu_custom_call.1} parent=1 // pred_check
      _
    $region15: #{tpu_custom_call.1} parent=1 // pred_check_branch
      %36 = sbr.rel (0) target = $region17
    $region16: #{tpu_custom_call.1} parent=1 // pred_region
      %37 = dma.done [#allocation4], 128
    $region17: #{tpu_custom_call.1} parent=1 // pred_fallthru
      _
    %38 = vsyncpa [#allocation3], 1
    %39 = vsyncpa [#allocation4], 1

</llo_original>
